<compile_context>
chip_gen: v5e
topology: v5e:2x2
jax: 0.10.0
libtpu: 0.0.40
codegen_flags: <defaults>
</compile_context>

<pallas_src>
import jax
import jax.numpy as jnp
from jax.experimental import pallas as pl
from jax.experimental.pallas import tpu as pltpu


def _round_up(x, m):
    return ((x + m - 1) // m) * m


def gnn_kernel(x_ref, adj_ref, w1_ref, b1_ref, w2_ref, b2_ref, w3_ref, b3_ref,
               logp_ref, z1_ref):
    """One graph per grid step.

    x_ref   : (N, F)        bf16
    adj_ref : (N, N)        bf16
    w*_ref  : bf16 weights (W2/W3 lane-padded to 128 columns)
    b*_ref  : f32 biases   (b3 padded columns = -1e30)
    logp_ref: (N, C_pad)    f32   lane-dense log_softmax output
    z1_ref  : (N, H2_pad)   f32   lane-dense Z1_before_do output
    """
    x = x_ref[...]        # (N, F)  bf16
    adj = adj_ref[...]    # (N, N)  bf16

    # --- layer 1: fc1 -> adj aggregation -> relu ----------------------------
    h = jnp.dot(x, w1_ref[...], preferred_element_type=jnp.float32) + b1_ref[...]
    z0 = jnp.maximum(
        jnp.dot(adj, h.astype(jnp.bfloat16), preferred_element_type=jnp.float32),
        0.0)
    # TODO(synk): training-mode dropout (pltpu.prng_random_bits mask) omitted;
    # eval-mode identity is used, matching model.eval().

    # --- layer 2: fc2 (lane-padded to 128 cols) -> adj aggregation -> relu ---
    h = jnp.dot(z0.astype(jnp.bfloat16), w2_ref[...],
                preferred_element_type=jnp.float32) + b2_ref[...]
    z1 = jnp.maximum(
        jnp.dot(adj, h.astype(jnp.bfloat16), preferred_element_type=jnp.float32),
        0.0)
    z1_ref[...] = z1      # (N, H2_pad) f32, single unmasked 128-lane store

    # --- layer 3: fc3 (lane-padded classes) -> log_softmax over dim 1 -------
    # Padded class columns get bias -1e30 => exp underflows to 0, max/lse use
    # only the real classes; padded logp columns are sliced off in the wrapper.
    logits = jnp.dot(z1.astype(jnp.bfloat16), w3_ref[...],
                     preferred_element_type=jnp.float32) + b3_ref[...]
    m = jnp.max(logits, axis=1, keepdims=True)
    shifted = logits - m
    lse = jnp.log(jnp.sum(jnp.exp(shifted), axis=1, keepdims=True))
    logp_ref[...] = shifted - lse   # (N, C_pad) f32, unmasked 128-lane store


def gnn_forward(x_in, adj, params):
    """x_in: (B, N, F) or (N, F); adj: (B, N, N) or (N, N).

    Returns (log_probs, Z1_before_do) with matching batch structure.
    """
    w1, b1, w2, b2, w3, b3 = params

    squeeze_batch = (x_in.ndim == 2)
    if squeeze_batch:
        x_in = x_in[None]
        adj = adj[None]

    B, N, F = x_in.shape
    H1 = w1.shape[1]
    H2 = w2.shape[1]
    C = w3.shape[1]
    H2_pad = _round_up(H2, 128)
    C_pad = _round_up(C, 128)

    # bf16 MXU operands; biases stay f32 (added to the f32 accumulator).
    x_bf = x_in.astype(jnp.bfloat16)
    adj_bf = adj.astype(jnp.bfloat16)
    w1_bf = w1.astype(jnp.bfloat16)
    b1_f = b1.astype(jnp.float32)
    # Lane-pad layer-2 output dim to 128 with zeros (padded Z1 columns == 0).
    w2_bf = jnp.pad(w2, ((0, 0), (0, H2_pad - H2))).astype(jnp.bfloat16)
    b2_f = jnp.pad(b2.astype(jnp.float32), ((0, 0), (0, H2_pad - H2)))
    # Lane-pad class dim to 128; padded classes get bias -1e30 (never win).
    w3_bf = jnp.pad(w3, ((0, H2_pad - H2), (0, C_pad - C))).astype(jnp.bfloat16)
    b3_f = jnp.pad(b3.astype(jnp.float32), ((0, 0), (0, C_pad - C)),
                   constant_values=-1e30)

    # Weights/biases stay VMEM-resident across the whole grid (block 0 always).
    def resident(a):
        return pl.BlockSpec(a.shape, lambda b: (0,) * a.ndim)

    flops = 2 * B * (N * F * H1 + N * N * H1 + N * H1 * H2_pad
                     + N * N * H2_pad + N * H2_pad * C_pad)
    transcendentals = B * N * (C_pad + 1)
    bytes_accessed = (
        2 * (x_bf.size + adj_bf.size + w1_bf.size + w2_bf.size + w3_bf.size)
        + 4 * (b1_f.size + b2_f.size + b3_f.size)
        + 4 * B * N * (C_pad + H2_pad))

    logp_pad, z1_pad = pl.pallas_call(
        gnn_kernel,
        out_shape=(
            jax.ShapeDtypeStruct((B, N, C_pad), jnp.float32),   # log_softmax
            jax.ShapeDtypeStruct((B, N, H2_pad), jnp.float32),  # Z1_before_do
        ),
        grid=(B,),
        in_specs=[
            pl.BlockSpec((None, N, F), lambda b: (b, 0, 0)),
            pl.BlockSpec((None, N, N), lambda b: (b, 0, 0)),
            resident(w1_bf), resident(b1_f),
            resident(w2_bf), resident(b2_f),
            resident(w3_bf), resident(b3_f),
        ],
        out_specs=(
            pl.BlockSpec((None, N, C_pad), lambda b: (b, 0, 0)),
            pl.BlockSpec((None, N, H2_pad), lambda b: (b, 0, 0)),
        ),
        compiler_params=pltpu.CompilerParams(
            dimension_semantics=("parallel",),
            # Plenty at these sizes; raise further if N (and adj = N^2) grows.
            vmem_limit_bytes=32 * 1024 * 1024,
        ),
        cost_estimate=pl.CostEstimate(
            flops=flops,
            transcendentals=transcendentals,
            bytes_accessed=bytes_accessed,
        ),
    )(x_bf, adj_bf, w1_bf, b1_f, w2_bf, b2_f, w3_bf, b3_f)

    log_probs = logp_pad[..., :C]
    z1_before_do = z1_pad[..., :H2]
    if squeeze_batch:
        log_probs = log_probs[0]
        z1_before_do = z1_before_do[0]
    return log_probs, z1_before_do


def init_linear(key, fan_in, fan_out):
    # Mimic torch nn.Linear default init: U(-1/sqrt(fan_in), 1/sqrt(fan_in))
    kw, kb = jax.random.split(key)
    bound = 1.0 / jnp.sqrt(fan_in)
    w = jax.random.uniform(kw, (fan_in, fan_out), jnp.float32, -bound, bound)
    b = jax.random.uniform(kb, (1, fan_out), jnp.float32, -bound, bound)
    return w, b


if __name__ == "__main__":
    B = 4            # batch of independent graphs (parallel grid axis)
    n_nodes = 16
    n_feat = 32
    n_hidden_1 = 32
    n_hidden_2 = 32
    n_class = 8

    key = jax.random.PRNGKey(0)
    k_x, k_adj, k1, k2, k3 = jax.random.split(key, 5)

    x_in = jax.random.normal(k_x, (B, n_nodes, n_feat), jnp.float32)

    # Simple symmetric row-normalized adjacency with self loops (per graph).
    a = (jax.random.uniform(k_adj, (B, n_nodes, n_nodes)) < 0.3).astype(jnp.float32)
    a = jnp.maximum(a, jnp.swapaxes(a, -1, -2)) + jnp.eye(n_nodes, dtype=jnp.float32)
    adj = a / jnp.sum(a, axis=-1, keepdims=True)

    w1, b1 = init_linear(k1, n_feat, n_hidden_1)
    w2, b2 = init_linear(k2, n_hidden_1, n_hidden_2)
    w3, b3 = init_linear(k3, n_hidden_2, n_class)
    params = (w1, b1, w2, b2, w3, b3)

    log_probs, z1_before_do = gnn_forward(x_in, adj, params)
    jax.block_until_ready((log_probs, z1_before_do))

    # Pure-JAX f32 reference (eval-mode dropout = identity).  Kernel uses bf16
    # MXU operands with f32 accumulation, so compare with a loose tolerance.
    h_ref = jnp.maximum(jnp.matmul(adj, x_in @ w1 + b1), 0.0)
    z1_ref = jnp.maximum(jnp.matmul(adj, h_ref @ w2 + b2), 0.0)
    logits_ref = z1_ref @ w3 + b3
    lp_ref = jax.nn.log_softmax(logits_ref, axis=-1)

    assert log_probs.shape == (B, n_nodes, n_class)
    assert z1_before_do.shape == (B, n_nodes, n_hidden_2)
    assert jnp.all(jnp.isfinite(log_probs)) and jnp.all(jnp.isfinite(z1_before_do))
    assert jnp.allclose(log_probs, lp_ref, atol=5e-2, rtol=5e-2), "log_softmax mismatch"
    assert jnp.allclose(z1_before_do, z1_ref, atol=5e-2, rtol=5e-2), "Z1 mismatch"

    print("KERNEL_OK")
</pallas_src>

<mosaic_0001>
module attributes {stable_mosaic.version = 11 : i64} {
  func.func @gnn_kernel(%arg0: i32, %arg1: memref<1x16x32xbf16, #tpu.memory_space<vmem>>, %arg2: memref<1x16x16xbf16, #tpu.memory_space<vmem>>, %arg3: memref<32x32xbf16, #tpu.memory_space<vmem>>, %arg4: memref<1x32xf32, #tpu.memory_space<vmem>>, %arg5: memref<32x128xbf16, #tpu.memory_space<vmem>>, %arg6: memref<1x128xf32, #tpu.memory_space<vmem>>, %arg7: memref<128x128xbf16, #tpu.memory_space<vmem>>, %arg8: memref<1x128xf32, #tpu.memory_space<vmem>>, %arg9: memref<1x16x128xf32, #tpu.memory_space<vmem>>, %arg10: memref<1x16x128xf32, #tpu.memory_space<vmem>>) attributes {dimension_semantics = [#tpu.dimension_semantics<parallel>], iteration_bounds = array<i64: 4>, scalar_prefetch = 0 : i64, scratch_operands = 0 : i64, tpu.core_type = #tpu.core_type<tc>, window_params = [{transform_indices = @transform_0, window_bounds = array<i64: 1, 16, 32>}, {transform_indices = @transform_1, window_bounds = array<i64: 1, 16, 16>}, {pipeline_mode = #tpu.pipeline_mode<synchronous>, transform_indices = @transform_2, window_bounds = array<i64: 32, 32>}, {pipeline_mode = #tpu.pipeline_mode<synchronous>, transform_indices = @transform_3, window_bounds = array<i64: 1, 32>}, {pipeline_mode = #tpu.pipeline_mode<synchronous>, transform_indices = @transform_4, window_bounds = array<i64: 32, 128>}, {pipeline_mode = #tpu.pipeline_mode<synchronous>, transform_indices = @transform_5, window_bounds = array<i64: 1, 128>}, {pipeline_mode = #tpu.pipeline_mode<synchronous>, transform_indices = @transform_6, window_bounds = array<i64: 128, 128>}, {pipeline_mode = #tpu.pipeline_mode<synchronous>, transform_indices = @transform_7, window_bounds = array<i64: 1, 128>}, {transform_indices = @transform_8, window_bounds = array<i64: 1, 16, 128>}, {transform_indices = @transform_9, window_bounds = array<i64: 1, 16, 128>}]} {
    %c0 = arith.constant 0 : index
    %c0_0 = arith.constant 0 : index
    %c0_1 = arith.constant 0 : index
    %0 = vector.load %arg1[%c0, %c0_0, %c0_1] : memref<1x16x32xbf16, #tpu.memory_space<vmem>>, vector<1x16x32xbf16>
    %1 = vector.shape_cast %0 : vector<1x16x32xbf16> to vector<16x32xbf16>
    %c0_2 = arith.constant 0 : index
    %c0_3 = arith.constant 0 : index
    %c0_4 = arith.constant 0 : index
    %2 = vector.load %arg2[%c0_2, %c0_3, %c0_4] : memref<1x16x16xbf16, #tpu.memory_space<vmem>>, vector<1x16x16xbf16>
    %3 = vector.shape_cast %2 : vector<1x16x16xbf16> to vector<16x16xbf16>
    %c0_5 = arith.constant 0 : index
    %c0_6 = arith.constant 0 : index
    %4 = vector.load %arg3[%c0_5, %c0_6] : memref<32x32xbf16, #tpu.memory_space<vmem>>, vector<32x32xbf16>
    %cst = arith.constant dense<0.000000e+00> : vector<16x32xf32>
    %5 = tpu.matmul %1, %4, %cst {dimension_numbers = #tpu.dot_dimension_numbers<[1], [0], [0], [1], [0, 0, 1, 1], [], []>} : vector<16x32xbf16>, vector<32x32xbf16>, vector<16x32xf32> -> vector<16x32xf32>
    %c0_7 = arith.constant 0 : index
    %c0_8 = arith.constant 0 : index
    %6 = vector.load %arg4[%c0_7, %c0_8] : memref<1x32xf32, #tpu.memory_space<vmem>>, vector<1x32xf32>
    %7 = vector.broadcast %6 : vector<1x32xf32> to vector<16x32xf32>
    %8 = arith.addf %5, %7 : vector<16x32xf32>
    %9 = arith.truncf %8 : vector<16x32xf32> to vector<16x32xbf16>
    %cst_9 = arith.constant dense<0.000000e+00> : vector<16x32xf32>
    %10 = tpu.matmul %3, %9, %cst_9 {dimension_numbers = #tpu.dot_dimension_numbers<[1], [0], [0], [1], [0, 0, 1, 1], [], []>} : vector<16x16xbf16>, vector<16x32xbf16>, vector<16x32xf32> -> vector<16x32xf32>
    %cst_10 = arith.constant 0.000000e+00 : f32
    %11 = vector.broadcast %cst_10 : f32 to vector<16x32xf32>
    %12 = arith.maximumf %10, %11 : vector<16x32xf32>
    %13 = arith.truncf %12 : vector<16x32xf32> to vector<16x32xbf16>
    %c0_11 = arith.constant 0 : index
    %c0_12 = arith.constant 0 : index
    %14 = vector.load %arg5[%c0_11, %c0_12] : memref<32x128xbf16, #tpu.memory_space<vmem>>, vector<32x128xbf16>
    %cst_13 = arith.constant dense<0.000000e+00> : vector<16x128xf32>
    %15 = tpu.matmul %13, %14, %cst_13 {dimension_numbers = #tpu.dot_dimension_numbers<[1], [0], [0], [1], [0, 0, 1, 1], [], []>} : vector<16x32xbf16>, vector<32x128xbf16>, vector<16x128xf32> -> vector<16x128xf32>
    %c0_14 = arith.constant 0 : index
    %c0_15 = arith.constant 0 : index
    %16 = vector.load %arg6[%c0_14, %c0_15] : memref<1x128xf32, #tpu.memory_space<vmem>>, vector<1x128xf32>
    %17 = vector.broadcast %16 : vector<1x128xf32> to vector<16x128xf32>
    %18 = arith.addf %15, %17 : vector<16x128xf32>
    %19 = arith.truncf %18 : vector<16x128xf32> to vector<16x128xbf16>
    %cst_16 = arith.constant dense<0.000000e+00> : vector<16x128xf32>
    %20 = tpu.matmul %3, %19, %cst_16 {dimension_numbers = #tpu.dot_dimension_numbers<[1], [0], [0], [1], [0, 0, 1, 1], [], []>} : vector<16x16xbf16>, vector<16x128xbf16>, vector<16x128xf32> -> vector<16x128xf32>
    %cst_17 = arith.constant 0.000000e+00 : f32
    %21 = vector.broadcast %cst_17 : f32 to vector<16x128xf32>
    %22 = arith.maximumf %20, %21 : vector<16x128xf32>
    %c0_18 = arith.constant 0 : index
    %c0_19 = arith.constant 0 : index
    %c0_20 = arith.constant 0 : index
    %23 = vector.load %arg10[%c0_18, %c0_19, %c0_20] : memref<1x16x128xf32, #tpu.memory_space<vmem>>, vector<1x16x128xf32>
    %24 = vector.shape_cast %23 : vector<1x16x128xf32> to vector<16x128xf32>
    %25 = vector.shape_cast %22 : vector<16x128xf32> to vector<1x16x128xf32>
    tpu.vector_store %arg10[%c0_18, %c0_19, %c0_20], %25 {strides = array<i32>} : memref<1x16x128xf32, #tpu.memory_space<vmem>>, vector<1x16x128xf32>,
    %26 = arith.truncf %22 : vector<16x128xf32> to vector<16x128xbf16>
    %c0_21 = arith.constant 0 : index
    %c0_22 = arith.constant 0 : index
    %27 = vector.load %arg7[%c0_21, %c0_22] : memref<128x128xbf16, #tpu.memory_space<vmem>>, vector<128x128xbf16>
    %cst_23 = arith.constant dense<0.000000e+00> : vector<16x128xf32>
    %28 = tpu.matmul %26, %27, %cst_23 {dimension_numbers = #tpu.dot_dimension_numbers<[1], [0], [0], [1], [0, 0, 1, 1], [], []>} : vector<16x128xbf16>, vector<128x128xbf16>, vector<16x128xf32> -> vector<16x128xf32>
    %c0_24 = arith.constant 0 : index
    %c0_25 = arith.constant 0 : index
    %29 = vector.load %arg8[%c0_24, %c0_25] : memref<1x128xf32, #tpu.memory_space<vmem>>, vector<1x128xf32>
    %30 = vector.broadcast %29 : vector<1x128xf32> to vector<16x128xf32>
    %31 = arith.addf %28, %30 : vector<16x128xf32>
    %cst_26 = arith.constant dense<0xFF800000> : vector<16xf32>
    %32 = vector.multi_reduction <maximumf>, %31, %cst_26 [1] : vector<16x128xf32> to vector<16xf32>
    %33 = vector.shape_cast %32 : vector<16xf32> to vector<16x1xf32>
    %34 = vector.broadcast %33 : vector<16x1xf32> to vector<16x128xf32>
    %35 = arith.subf %31, %34 : vector<16x128xf32>
    %36 = math.exp %35 : vector<16x128xf32>
    %cst_27 = arith.constant dense<0.000000e+00> : vector<16xf32>
    %37 = vector.multi_reduction <add>, %36, %cst_27 [1] : vector<16x128xf32> to vector<16xf32>
    %38 = vector.shape_cast %37 : vector<16xf32> to vector<16x1xf32>
    %39 = math.log %38 : vector<16x1xf32>
    %40 = vector.broadcast %39 : vector<16x1xf32> to vector<16x128xf32>
    %41 = arith.subf %35, %40 : vector<16x128xf32>
    %c0_28 = arith.constant 0 : index
    %c0_29 = arith.constant 0 : index
    %c0_30 = arith.constant 0 : index
    %42 = vector.load %arg9[%c0_28, %c0_29, %c0_30] : memref<1x16x128xf32, #tpu.memory_space<vmem>>, vector<1x16x128xf32>
    %43 = vector.shape_cast %42 : vector<1x16x128xf32> to vector<16x128xf32>
    %44 = vector.shape_cast %41 : vector<16x128xf32> to vector<1x16x128xf32>
    tpu.vector_store %arg9[%c0_28, %c0_29, %c0_30], %44 {strides = array<i32>} : memref<1x16x128xf32, #tpu.memory_space<vmem>>, vector<1x16x128xf32>,
    return
  }
  func.func @transform_0(%arg0: i32) -> (i32, i32, i32) {
    %c0_i32 = arith.constant 0 : i32
    %c0_i32_0 = arith.constant 0 : i32
    %c0_i32_1 = arith.constant 0 : i32
    return %arg0, %c0_i32, %c0_i32_0 : i32, i32, i32
  }
  func.func @transform_1(%arg0: i32) -> (i32, i32, i32) {
    %c0_i32 = arith.constant 0 : i32
    %c0_i32_0 = arith.constant 0 : i32
    %c0_i32_1 = arith.constant 0 : i32
    return %arg0, %c0_i32, %c0_i32_0 : i32, i32, i32
  }
  func.func @transform_2(%arg0: i32) -> (i32, i32) {
    %c0_i32 = arith.constant 0 : i32
    %c0_i32_0 = arith.constant 0 : i32
    %c0_i32_1 = arith.constant 0 : i32
    return %c0_i32, %c0_i32_0 : i32, i32
  }
  func.func @transform_3(%arg0: i32) -> (i32, i32) {
    %c0_i32 = arith.constant 0 : i32
    %c0_i32_0 = arith.constant 0 : i32
    %c0_i32_1 = arith.constant 0 : i32
    return %c0_i32, %c0_i32_0 : i32, i32
  }
  func.func @transform_4(%arg0: i32) -> (i32, i32) {
    %c0_i32 = arith.constant 0 : i32
    %c0_i32_0 = arith.constant 0 : i32
    %c0_i32_1 = arith.constant 0 : i32
    return %c0_i32, %c0_i32_0 : i32, i32
  }
  func.func @transform_5(%arg0: i32) -> (i32, i32) {
    %c0_i32 = arith.constant 0 : i32
    %c0_i32_0 = arith.constant 0 : i32
    %c0_i32_1 = arith.constant 0 : i32
    return %c0_i32, %c0_i32_0 : i32, i32
  }
  func.func @transform_6(%arg0: i32) -> (i32, i32) {
    %c0_i32 = arith.constant 0 : i32
    %c0_i32_0 = arith.constant 0 : i32
    %c0_i32_1 = arith.constant 0 : i32
    return %c0_i32, %c0_i32_0 : i32, i32
  }
  func.func @transform_7(%arg0: i32) -> (i32, i32) {
    %c0_i32 = arith.constant 0 : i32
    %c0_i32_0 = arith.constant 0 : i32
    %c0_i32_1 = arith.constant 0 : i32
    return %c0_i32, %c0_i32_0 : i32, i32
  }
  func.func @transform_8(%arg0: i32) -> (i32, i32, i32) {
    %c0_i32 = arith.constant 0 : i32
    %c0_i32_0 = arith.constant 0 : i32
    %c0_i32_1 = arith.constant 0 : i32
    return %arg0, %c0_i32, %c0_i32_0 : i32, i32, i32
  }
  func.func @transform_9(%arg0: i32) -> (i32, i32, i32) {
    %c0_i32 = arith.constant 0 : i32
    %c0_i32_0 = arith.constant 0 : i32
    %c0_i32_1 = arith.constant 0 : i32
    return %arg0, %c0_i32, %c0_i32_0 : i32, i32, i32
  }
}

</mosaic_0001>

<llo_original>
// kernel: tpu_custom_call.1
$region0: #{tpu_custom_call.1}
  #allocation0 [shape = 'u32[]', space=smem, size = 0x4, offset = 0x4, fixed_abs, tag = 'smem constant byte address 0x4 - core index']
  #allocation1 [shape = 'u32[72,128]{1,0:T(1,128)}', space=vmem, size = 0x9000, scoped, tag = 'internal scratch']
  %s0 = inlined_call_operand.hbm [shape: bf16[4,16,32], index: 0, kind: input, shape index: {}]
  %s1 = inlined_call_operand.hbm [shape: bf16[4,16,16], index: 1, kind: input, shape index: {}]
  %s2 = inlined_call_operand.hbm [shape: bf16[32,32], index: 2, kind: input, shape index: {}]
  %s3 = inlined_call_operand.vmem [shape: f32[1,32], index: 3, kind: input, shape index: {}]
  %s4 = inlined_call_operand.hbm [shape: bf16[32,128], index: 4, kind: input, shape index: {}]
  %s5 = inlined_call_operand.vmem [shape: f32[1,128], index: 5, kind: input, shape index: {}]
  %s6 = inlined_call_operand.hbm [shape: bf16[128,128], index: 6, kind: input, shape index: {}]
  %s7 = inlined_call_operand.vmem [shape: f32[1,128], index: 7, kind: input, shape index: {}]
  %s8 = inlined_call_operand.hbm [shape: f32[4,16,128], index: 8, kind: output, shape index: {0}]
  %s9 = inlined_call_operand.hbm [shape: f32[4,16,128], index: 9, kind: output, shape index: {1}]
  %10 = xla_tuple %s8, %s9
  %s11 = sld [smem:[#allocation0]]
  $region93: #{tpu_custom_call.1} parent=0
    _
  %s13 = ssub.s32 1, %s11
  %s14 = scalar_select 0, %s13, %s11
  $region1: #{tpu_custom_call.1} parent=0
    #allocation2 [shape = 'u8[8192]{0}', space=vmem, size = 0x2000, scoped, tag = 'input window, operand 0']
    #allocation3 [shape = 's32[2]{0}', space=sflag, size = 0x8, scoped, tag = 'scoped memory for tpu_custom_call.1']
    #allocation4 [shape = 's32[2]{0}', space=sflag, size = 0x8, scoped, tag = 'scoped memory for tpu_custom_call.1']
    #allocation5 [shape = 'u8[8192]{0}', space=vmem, size = 0x2000, scoped, tag = 'input window, operand 1']
    #allocation6 [shape = 's32[2]{0}', space=sflag, size = 0x8, scoped, tag = 'scoped memory for tpu_custom_call.1']
    #allocation7 [shape = 'u8[8192]{0}', space=vmem, size = 0x2000, scoped, tag = 'input window, operand 2, single buffered']
    #allocation8 [shape = 'u8[8192]{0}', space=vmem, size = 0x2000, scoped, tag = 'input window, operand 4, single buffered']
    #allocation9 [shape = 's32[1]{0}', space=sflag, size = 0x4, scoped, tag = 'scoped memory for tpu_custom_call.1']
    #allocation10 [shape = 'u8[32768]{0}', space=vmem, size = 0x8000, scoped, tag = 'input window, operand 6, single buffered']
    #allocation11 [shape = 'u8[16384]{0}', space=vmem, size = 0x4000, scoped, tag = 'output window, operand 0']
    #allocation12 [shape = 'u8[16384]{0}', space=vmem, size = 0x4000, scoped, tag = 'output window, operand 1']
    #allocation13 [shape = 's32[2]{0}', space=sflag, size = 0x8, scoped, tag = 'scoped memory for tpu_custom_call.1']
    %15 = vsyncpa [#allocation3], 0
    %s16 = scalar_lea.sflag [#allocation3], 1
    %17 = vsyncpa %s16, 0
    %18 = vsyncpa [#allocation6], 0
    %s19 = scalar_lea.sflag [#allocation6], 1
    %20 = vsyncpa %s19, 0
    %21 = vsyncpa [#allocation9], 0
    %22 = vsyncpa [#allocation4], 0
    %s23 = scalar_lea.sflag [#allocation4], 1
    %24 = vsyncpa %s23, 0
    %25 = vsyncpa [#allocation13], 0
    %s26 = scalar_lea.sflag [#allocation13], 1
    %27 = vsyncpa %s26, 0
    loop: start=0, step=1, limit=6
    $region2: #{tpu_custom_call.1} parent=1 // loop_pre_header
      _
    $region3: #{tpu_custom_call.1} parent=1 // loop_header
      %s29 = sphi 0, %s33
      %p30 = scmp.ge.s32.totalorder %s29, 6
      %s39 = sphi 0, %s41
      %s42 = sphi 0, %s39
      %s43 = sphi 0, %s42
      %s59 = sphi 0, %s43
      %s65 = sphi 0, %s67
      %s68 = sphi 0, %s65
      %s69 = sphi 0, %s68
      %s85 = sphi 0, %s69
      %s89 = sphi 0, %s89
      %s91 = sphi 0, %s89
      %s92 = sphi 0, %s91
      %s106 = sphi 0, %s92
      %s110 = sphi 0, %s110
      %s112 = sphi 0, %s110
      %s113 = sphi 0, %s112
      %s127 = sphi 0, %s113
      %s131 = sphi 0, %s131
      %s133 = sphi 0, %s131
      %s134 = sphi 0, %s133
      %s148 = sphi 0, %s134
      %s152 = sphi 0, %s152
      %s154 = sphi 0, %s152
      %s155 = sphi 0, %s154
      %s169 = sphi 0, %s155
      %s173 = sphi 0, %s173
      %s175 = sphi 0, %s173
      %s176 = sphi 0, %s175
      %s190 = sphi 0, %s176
      %s194 = sphi 0, %s194
      %s196 = sphi 0, %s194
      %s197 = sphi 0, %s196
      %s211 = sphi 0, %s197
      %s217 = sphi 0, %s219
      %s220 = sphi 0, %s217
      %s221 = sphi 0, %s220
      %s237 = sphi 0, %s221
      %s243 = sphi 0, %s245
      %s246 = sphi 0, %s243
      %s247 = sphi 0, %s246
      %s263 = sphi 0, %s247
    $region4: #{tpu_custom_call.1} parent=1 // loop_header_branch
      %32 = sbr.rel (%p30) target = $region8
    $region5: #{tpu_custom_call.1} parent=1 // loop_body
      %s34 = ssub.s32 %s29, 1
      %s35 = ssub.s32 %s29, 2
      %s36 = sadd.s32 %s29, 1
      %s37 = ssub.s32 %s29, %s36
      %p38 = scmp.eq.s32.totalorder %s37, 0
      %s40 = sadd.s32 %s39, 1
      %s41 = scalar_select %p38, %s39, %s40
      %p44 = pneg %p38
      %p45 = scmp.eq.s32.totalorder %s29, 3
      %p46 = por %p44, %p45
      %p47 = scmp.ne.s32.totalorder %s39, %s42
      %p48 = scmp.eq.s32.totalorder %s29, 0
      %p49 = por %p47, %p48
      %p50 = scmp.ne.s32.totalorder %s39, %s42
      %p51 = scmp.eq.s32.totalorder %s34, 3
      %p52 = por %p50, %p51
      %p53 = scmp.ne.s32.totalorder %s42, %s43
      %p54 = scmp.eq.s32.totalorder %s34, 0
      %p55 = por %p53, %p54
      %p56 = scmp.ne.s32.totalorder %s42, %s43
      %p57 = scmp.eq.s32.totalorder %s35, 3
      %p58 = por %p56, %p57
      %p60 = scmp.ne.s32.totalorder %s43, %s59
      %p61 = scmp.eq.s32.totalorder %s35, 0
      %p62 = por %p60, %p61
      %s63 = ssub.s32 %s29, %s36
      %p64 = scmp.eq.s32.totalorder %s63, 0
      %s66 = sadd.s32 %s65, 1
      %s67 = scalar_select %p64, %s65, %s66
      %p70 = pneg %p64
      %p71 = scmp.eq.s32.totalorder %s29, 3
      %p72 = por %p70, %p71
      %p73 = scmp.ne.s32.totalorder %s65, %s68
      %p74 = scmp.eq.s32.totalorder %s29, 0
      %p75 = por %p73, %p74
      %p76 = scmp.ne.s32.totalorder %s65, %s68
      %p77 = scmp.eq.s32.totalorder %s34, 3
      %p78 = por %p76, %p77
      %p79 = scmp.ne.s32.totalorder %s68, %s69
      %p80 = scmp.eq.s32.totalorder %s34, 0
      %p81 = por %p79, %p80
      %p82 = scmp.ne.s32.totalorder %s68, %s69
      %p83 = scmp.eq.s32.totalorder %s35, 3
      %p84 = por %p82, %p83
      %p86 = scmp.ne.s32.totalorder %s69, %s85
      %p87 = scmp.eq.s32.totalorder %s35, 0
      %p88 = por %p86, %p87
      %s90 = sadd.s32 %s89, 1
      %p93 = scmp.eq.s32.totalorder %s29, 3
      %p94 = scmp.ne.s32.totalorder %s89, %s91
      %p95 = scmp.eq.s32.totalorder %s29, 0
      %p96 = por %p94, %p95
      %p97 = scmp.ne.s32.totalorder %s89, %s91
      %p98 = scmp.eq.s32.totalorder %s34, 3
      %p99 = por %p97, %p98
      %p100 = scmp.ne.s32.totalorder %s91, %s92
      %p101 = scmp.eq.s32.totalorder %s34, 0
      %p102 = por %p100, %p101
      %p103 = scmp.ne.s32.totalorder %s91, %s92
      %p104 = scmp.eq.s32.totalorder %s35, 3
      %p105 = por %p103, %p104
      %p107 = scmp.ne.s32.totalorder %s92, %s106
      %p108 = scmp.eq.s32.totalorder %s35, 0
      %p109 = por %p107, %p108
      %s111 = sadd.s32 %s110, 1
      %p114 = scmp.eq.s32.totalorder %s29, 3
      %p115 = scmp.ne.s32.totalorder %s110, %s112
      %p116 = scmp.eq.s32.totalorder %s29, 0
      %p117 = por %p115, %p116
      %p118 = scmp.ne.s32.totalorder %s110, %s112
      %p119 = scmp.eq.s32.totalorder %s34, 3
      %p120 = por %p118, %p119
      %p121 = scmp.ne.s32.totalorder %s112, %s113
      %p122 = scmp.eq.s32.totalorder %s34, 0
      %p123 = por %p121, %p122
      %p124 = scmp.ne.s32.totalorder %s112, %s113
      %p125 = scmp.eq.s32.totalorder %s35, 3
      %p126 = por %p124, %p125
      %p128 = scmp.ne.s32.totalorder %s113, %s127
      %p129 = scmp.eq.s32.totalorder %s35, 0
      %p130 = por %p128, %p129
      %s132 = sadd.s32 %s131, 1
      %p135 = scmp.eq.s32.totalorder %s29, 3
      %p136 = scmp.ne.s32.totalorder %s131, %s133
      %p137 = scmp.eq.s32.totalorder %s29, 0
      %p138 = por %p136, %p137
      %p139 = scmp.ne.s32.totalorder %s131, %s133
      %p140 = scmp.eq.s32.totalorder %s34, 3
      %p141 = por %p139, %p140
      %p142 = scmp.ne.s32.totalorder %s133, %s134
      %p143 = scmp.eq.s32.totalorder %s34, 0
      %p144 = por %p142, %p143
      %p145 = scmp.ne.s32.totalorder %s133, %s134
      %p146 = scmp.eq.s32.totalorder %s35, 3
      %p147 = por %p145, %p146
      %p149 = scmp.ne.s32.totalorder %s134, %s148
      %p150 = scmp.eq.s32.totalorder %s35, 0
      %p151 = por %p149, %p150
      %s153 = sadd.s32 %s152, 1
      %p156 = scmp.eq.s32.totalorder %s29, 3
      %p157 = scmp.ne.s32.totalorder %s152, %s154
      %p158 = scmp.eq.s32.totalorder %s29, 0
      %p159 = por %p157, %p158
      %p160 = scmp.ne.s32.totalorder %s152, %s154
      %p161 = scmp.eq.s32.totalorder %s34, 3
      %p162 = por %p160, %p161
      %p163 = scmp.ne.s32.totalorder %s154, %s155
      %p164 = scmp.eq.s32.totalorder %s34, 0
      %p165 = por %p163, %p164
      %p166 = scmp.ne.s32.totalorder %s154, %s155
      %p167 = scmp.eq.s32.totalorder %s35, 3
      %p168 = por %p166, %p167
      %p170 = scmp.ne.s32.totalorder %s155, %s169
      %p171 = scmp.eq.s32.totalorder %s35, 0
      %p172 = por %p170, %p171
      %s174 = sadd.s32 %s173, 1
      %p177 = scmp.eq.s32.totalorder %s29, 3
      %p178 = scmp.ne.s32.totalorder %s173, %s175
      %p179 = scmp.eq.s32.totalorder %s29, 0
      %p180 = por %p178, %p179
      %p181 = scmp.ne.s32.totalorder %s173, %s175
      %p182 = scmp.eq.s32.totalorder %s34, 3
      %p183 = por %p181, %p182
      %p184 = scmp.ne.s32.totalorder %s175, %s176
      %p185 = scmp.eq.s32.totalorder %s34, 0
      %p186 = por %p184, %p185
      %p187 = scmp.ne.s32.totalorder %s175, %s176
      %p188 = scmp.eq.s32.totalorder %s35, 3
      %p189 = por %p187, %p188
      %p191 = scmp.ne.s32.totalorder %s176, %s190
      %p192 = scmp.eq.s32.totalorder %s35, 0
      %p193 = por %p191, %p192
      %s195 = sadd.s32 %s194, 1
      %p198 = scmp.eq.s32.totalorder %s29, 3
      %p199 = scmp.ne.s32.totalorder %s194, %s196
      %p200 = scmp.eq.s32.totalorder %s29, 0
      %p201 = por %p199, %p200
      %p202 = scmp.ne.s32.totalorder %s194, %s196
      %p203 = scmp.eq.s32.totalorder %s34, 3
      %p204 = por %p202, %p203
      %p205 = scmp.ne.s32.totalorder %s196, %s197
      %p206 = scmp.eq.s32.totalorder %s34, 0
      %p207 = por %p205, %p206
      %p208 = scmp.ne.s32.totalorder %s196, %s197
      %p209 = scmp.eq.s32.totalorder %s35, 3
      %p210 = por %p208, %p209
      %p212 = scmp.ne.s32.totalorder %s197, %s211
      %p213 = scmp.eq.s32.totalorder %s35, 0
      %p214 = por %p212, %p213
      %s215 = ssub.s32 %s29, %s36
      %p216 = scmp.eq.s32.totalorder %s215, 0
      %s218 = sadd.s32 %s217, 1
      %s219 = scalar_select %p216, %s217, %s218
      %p222 = pneg %p216
      %p223 = scmp.eq.s32.totalorder %s29, 3
      %p224 = por %p222, %p223
      %p225 = scmp.ne.s32.totalorder %s217, %s220
      %p226 = scmp.eq.s32.totalorder %s29, 0
      %p227 = por %p225, %p226
      %p228 = scmp.ne.s32.totalorder %s217, %s220
      %p229 = scmp.eq.s32.totalorder %s34, 3
      %p230 = por %p228, %p229
      %p231 = scmp.ne.s32.totalorder %s220, %s221
      %p232 = scmp.eq.s32.totalorder %s34, 0
      %p233 = por %p231, %p232
      %p234 = scmp.ne.s32.totalorder %s220, %s221
      %p235 = scmp.eq.s32.totalorder %s35, 3
      %p236 = por %p234, %p235
      %p238 = scmp.ne.s32.totalorder %s221, %s237
      %p239 = scmp.eq.s32.totalorder %s35, 0
      %p240 = por %p238, %p239
      %s241 = ssub.s32 %s29, %s36
      %p242 = scmp.eq.s32.totalorder %s241, 0
      %s244 = sadd.s32 %s243, 1
      %s245 = scalar_select %p242, %s243, %s244
      %p248 = pneg %p242
      %p249 = scmp.eq.s32.totalorder %s29, 3
      %p250 = por %p248, %p249
      %p251 = scmp.ne.s32.totalorder %s243, %s246
      %p252 = scmp.eq.s32.totalorder %s29, 0
      %p253 = por %p251, %p252
      %p254 = scmp.ne.s32.totalorder %s243, %s246
      %p255 = scmp.eq.s32.totalorder %s34, 3
      %p256 = por %p254, %p255
      %p257 = scmp.ne.s32.totalorder %s246, %s247
      %p258 = scmp.eq.s32.totalorder %s34, 0
      %p259 = por %p257, %p258
      %p260 = scmp.ne.s32.totalorder %s246, %s247
      %p261 = scmp.eq.s32.totalorder %s35, 3
      %p262 = por %p260, %p261
      %p264 = scmp.ne.s32.totalorder %s247, %s263
      %p265 = scmp.eq.s32.totalorder %s35, 0
      %p266 = por %p264, %p265
      %p267 = scmp.le.s32.totalorder 1, %s29
      %p268 = scmp.lt.s32.totalorder %s29, 5
      %p269 = pnand %p267, %p268
      %p270 = pneg %p269
      // Predicated region
      $region9: #{tpu_custom_call.1} parent=5 // pred_check
        _
      $region10: #{tpu_custom_call.1} parent=5 // pred_check_branch
        %272 = sbr.rel (%p269) target = $region12
      $region11: #{tpu_custom_call.1} parent=5 // pred_region
        %s273 = ssub.s32 %s29, 1
        // Predicated region
        $region13: #{tpu_custom_call.1} parent=11 // pred_check
          %p274 = pneg %p102
        $region14: #{tpu_custom_call.1} parent=11 // pred_check_branch
          %276 = sbr.rel (%p274) target = $region16
        $region15: #{tpu_custom_call.1} parent=11 // pred_region
          %278 = vsyncadd [#allocation6], 0
          %s279 = sshll.u32 %s2, 4
          %s280 = int_to_ptr.hbm [resolvable:$true] %s279
          %s281 = sshll.u32 [#allocation7], 4
          %s282 = int_to_ptr.vmem [resolvable:$true] %s281
          %287 = dma.hbm_to_vmem [thread:$0]  %s280, 256, %s282, [#allocation6], 64, 64, 4
        $region16: #{tpu_custom_call.1} parent=11 // pred_fallthru
          _
        // Predicated region
        $region17: #{tpu_custom_call.1} parent=11 // pred_check
          %p288 = pneg %p123
        $region18: #{tpu_custom_call.1} parent=11 // pred_check_branch
          %290 = sbr.rel (%p288) target = $region20
        $region19: #{tpu_custom_call.1} parent=11 // pred_region
          _
        $region20: #{tpu_custom_call.1} parent=11 // pred_fallthru
          _
        // Predicated region
        $region21: #{tpu_custom_call.1} parent=11 // pred_check
          %p291 = pneg %p144
        $region22: #{tpu_custom_call.1} parent=11 // pred_check_branch
          %293 = sbr.rel (%p291) target = $region24
        $region23: #{tpu_custom_call.1} parent=11 // pred_region
          %295 = vsyncadd [#allocation9], 0
          %s296 = sshll.u32 %s4, 4
          %s297 = int_to_ptr.hbm [resolvable:$true] %s296
          %s298 = sshll.u32 [#allocation8], 4
          %s299 = int_to_ptr.vmem [resolvable:$true] %s298
          %304 = dma.hbm_to_vmem [thread:$0]  %s297, 256, %s299, [#allocation9], 64, 64, 4
        $region24: #{tpu_custom_call.1} parent=11 // pred_fallthru
          _
        // Predicated region
        $region25: #{tpu_custom_call.1} parent=11 // pred_check
          %p305 = pneg %p165
        $region26: #{tpu_custom_call.1} parent=11 // pred_check_branch
          %307 = sbr.rel (%p305) target = $region28
        $region27: #{tpu_custom_call.1} parent=11 // pred_region
          _
        $region28: #{tpu_custom_call.1} parent=11 // pred_fallthru
          _
        // Predicated region
        $region29: #{tpu_custom_call.1} parent=11 // pred_check
          %p308 = pneg %p186
        $region30: #{tpu_custom_call.1} parent=11 // pred_check_branch
          %310 = sbr.rel (%p308) target = $region32
        $region31: #{tpu_custom_call.1} parent=11 // pred_region
          %312 = vsyncadd [#allocation9], 0
          %s313 = sshll.u32 %s6, 4
          %s314 = int_to_ptr.hbm [resolvable:$true] %s313
          %s315 = sshll.u32 [#allocation10], 4
          %s316 = int_to_ptr.vmem [resolvable:$true] %s315
          %321 = dma.hbm_to_vmem [thread:$0]  %s314, 1024, %s316, [#allocation9], 64, 64, 4
        $region32: #{tpu_custom_call.1} parent=11 // pred_fallthru
          _
        // Predicated region
        $region33: #{tpu_custom_call.1} parent=11 // pred_check
          %p322 = pneg %p207
        $region34: #{tpu_custom_call.1} parent=11 // pred_check_branch
          %324 = sbr.rel (%p322) target = $region36
        $region35: #{tpu_custom_call.1} parent=11 // pred_region
          _
        $region36: #{tpu_custom_call.1} parent=11 // pred_fallthru
          _
      $region12: #{tpu_custom_call.1} parent=5 // pred_fallthru
        _
      %p325 = scmp.lt.s32.totalorder %s29, 4
      // Predicated region
      $region37: #{tpu_custom_call.1} parent=5 // pred_check
        %p326 = pneg %p325
      $region38: #{tpu_custom_call.1} parent=5 // pred_check_branch
        %328 = sbr.rel (%p326) target = $region40
      $region39: #{tpu_custom_call.1} parent=5 // pred_region
        // Predicated region
        $region41: #{tpu_custom_call.1} parent=39 // pred_check
          %p329 = pneg %p49
        $region42: #{tpu_custom_call.1} parent=39 // pred_check_branch
          %331 = sbr.rel (%p329) target = $region44
        $region43: #{tpu_custom_call.1} parent=39 // pred_region
          %s332 = sand.u32 %s39, 1
          %s333 = scalar_lea.sflag [#allocation3], %s332
          %s334 = sand.u32 %s39, 1
          %s335 = smul.addr %s334, 8
          %s336 = scalar_lea.vmem [#allocation2], %s335
          %338 = vsyncadd %s333, 0
          %s339 = smul.addr %s29, 2
          %s340 = smul.addr %s339, 4
          %s341 = scalar_lea.hbm %s0, %s340
          %s342 = sshll.u32 %s341, 4
          %s343 = int_to_ptr.hbm [resolvable:$true] %s342
          %s344 = sshll.u32 %s336, 4
          %s345 = int_to_ptr.vmem [resolvable:$true] %s344
          %350 = dma.hbm_to_vmem [thread:$0]  %s343, 128, %s345, %s333, 64, 64, 4
        $region44: #{tpu_custom_call.1} parent=39 // pred_fallthru
          _
        // Predicated region
        $region45: #{tpu_custom_call.1} parent=39 // pred_check
          %p351 = pneg %p75
        $region46: #{tpu_custom_call.1} parent=39 // pred_check_branch
          %353 = sbr.rel (%p351) target = $region48
        $region47: #{tpu_custom_call.1} parent=39 // pred_region
          %s354 = sand.u32 %s29, 1
          %s355 = scalar_lea.sflag [#allocation6], %s354
          %s356 = sand.u32 %s65, 1
          %s357 = smul.addr %s356, 8
          %s358 = scalar_lea.vmem [#allocation5], %s357
          %360 = vsyncadd %s355, 0
          %s361 = smul.addr %s29, 2
          %s362 = smul.addr %s361, 4
          %s363 = scalar_lea.hbm %s1, %s362
          %s364 = sshll.u32 %s363, 4
          %s365 = int_to_ptr.hbm [resolvable:$true] %s364
          %s366 = sshll.u32 %s358, 4
          %s367 = int_to_ptr.vmem [resolvable:$true] %s366
          %372 = dma.hbm_to_vmem [thread:$0]  %s365, 128, %s367, %s355, 64, 64, 4
        $region48: #{tpu_custom_call.1} parent=39 // pred_fallthru
          _
      $region40: #{tpu_custom_call.1} parent=5 // pred_fallthru
        _
      %p373 = scmp.le.s32.totalorder 1, %s29
      %p374 = scmp.lt.s32.totalorder %s29, 5
      %p375 = pnand %p373, %p374
      %p376 = pneg %p375
      // Predicated region
      $region49: #{tpu_custom_call.1} parent=5 // pred_check
        _
      $region50: #{tpu_custom_call.1} parent=5 // pred_check_branch
        %378 = sbr.rel (%p375) target = $region52
      $region51: #{tpu_custom_call.1} parent=5 // pred_region
        %s379 = ssub.s32 %s29, 1
        %s380 = sand.u32 %s42, 1
        %s381 = scalar_lea.sflag [#allocation3], %s380
        %s382 = sand.u32 %s42, 1
        %s383 = smul.addr %s382, 8
        %s384 = scalar_lea.vmem [#allocation2], %s383
        // Predicated region
        $region53: #{tpu_custom_call.1} parent=51 // pred_check
          %p385 = pneg %p55
        $region54: #{tpu_custom_call.1} parent=51 // pred_check_branch
          %387 = sbr.rel (%p385) target = $region56
        $region55: #{tpu_custom_call.1} parent=51 // pred_region
          %389 = dma.done %s381, 128
        $region56: #{tpu_custom_call.1} parent=51 // pred_fallthru
          _
        %s390 = sand.u32 %s34, 1
        %s391 = scalar_lea.sflag [#allocation6], %s390
        %s392 = sand.u32 %s68, 1
        %s393 = smul.addr %s392, 8
        %s394 = scalar_lea.vmem [#allocation5], %s393
        // Predicated region
        $region57: #{tpu_custom_call.1} parent=51 // pred_check
          %p395 = pneg %p81
        $region58: #{tpu_custom_call.1} parent=51 // pred_check_branch
          %397 = sbr.rel (%p395) target = $region60
        $region59: #{tpu_custom_call.1} parent=51 // pred_region
          %399 = dma.done %s391, 128
        $region60: #{tpu_custom_call.1} parent=51 // pred_fallthru
          _
        // Predicated region
        $region61: #{tpu_custom_call.1} parent=51 // pred_check
          %p400 = pneg %p102
        $region62: #{tpu_custom_call.1} parent=51 // pred_check_branch
          %402 = sbr.rel (%p400) target = $region64
        $region63: #{tpu_custom_call.1} parent=51 // pred_region
          %404 = dma.done [#allocation6], 256
        $region64: #{tpu_custom_call.1} parent=51 // pred_fallthru
          _
        // Predicated region
        $region65: #{tpu_custom_call.1} parent=51 // pred_check
          %p405 = pneg %p144
        $region66: #{tpu_custom_call.1} parent=51 // pred_check_branch
          %407 = sbr.rel (%p405) target = $region68
        $region67: #{tpu_custom_call.1} parent=51 // pred_region
          %409 = dma.done [#allocation9], 256
        $region68: #{tpu_custom_call.1} parent=51 // pred_fallthru
          _
        // Predicated region
        $region69: #{tpu_custom_call.1} parent=51 // pred_check
          %p410 = pneg %p186
        $region70: #{tpu_custom_call.1} parent=51 // pred_check_branch
          %412 = sbr.rel (%p410) target = $region72
        $region71: #{tpu_custom_call.1} parent=51 // pred_region
          %414 = dma.done [#allocation9], 1024
        $region72: #{tpu_custom_call.1} parent=51 // pred_fallthru
          _
        %s415 = sand.u32 %s42, 1
        %s416 = scalar_lea.sflag [#allocation3], %s415
        %s417 = sand.u32 %s42, 1
        %s418 = smul.addr %s417, 8
        %s419 = scalar_lea.vmem [#allocation2], %s418
        %p420 = pneg %p55
        %p421 = pneg %p52
        %s422 = sand.u32 %s34, 1
        %s423 = scalar_lea.sflag [#allocation6], %s422
        %s424 = sand.u32 %s68, 1
        %s425 = smul.addr %s424, 8
        %s426 = scalar_lea.vmem [#allocation5], %s425
        %p427 = pneg %p81
        %p428 = pneg %p78
        %p429 = pneg %p102
        %p430 = pneg %p99
        %p431 = pneg %p123
        %p432 = pneg %p120
        %p433 = pneg %p144
        %p434 = pneg %p141
        %p435 = pneg %p165
        %p436 = pneg %p162
        %p437 = pneg %p186
        %p438 = pneg %p183
        %p439 = pneg %p207
        %p440 = pneg %p204
        %p441 = pneg %p233
        %p442 = pneg %p230
        %s443 = sand.u32 %s220, 1
        %s444 = scalar_lea.sflag [#allocation4], %s443
        %s445 = sand.u32 %s220, 1
        %s446 = smul.addr %s445, 16
        %s447 = scalar_lea.vmem [#allocation11], %s446
        %p448 = pneg %p259
        %p449 = pneg %p256
        %s450 = sand.u32 %s246, 1
        %s451 = scalar_lea.sflag [#allocation13], %s450
        %s452 = sand.u32 %s246, 1
        %s453 = smul.addr %s452, 16
        %s454 = scalar_lea.vmem [#allocation12], %s453
        %v456 = vld [vmem:[%s384] sm:$0xf]
        %v457 = vld [vmem:[%s384 + $0x4] sm:$0xf]
        %v458 = vld [vmem:[%s394] sm:$0xf]
        %v459 = vld [vmem:[%s394 + $0x4] sm:$0xf]
        %v460 = vld [vmem:[#allocation7] sm:$0xf]
        %v461 = vld [vmem:[#allocation7 + $0x4] sm:$0xf]
        %v462 = vld [vmem:[#allocation7 + $0x8] sm:$0xf]
        %v463 = vld [vmem:[#allocation7 + $0xc] sm:$0xf]
        %v464 = vld [vmem:[%s3] sm:$0x1]
        %v466 = vperm.slane %v464, 0
        %v470 = vunpack.c.l.b16 %v456
        %v471 = vunpack.c.l.b16 %v457
        %v472 = vpack.c.b16 %v471, %v470
        %v477 = vunpack.c.l.b16 %v460
        %v478 = vunpack.c.l.b16 %v461
        %v479 = vunpack.c.l.b16 %v462
        %v480 = vunpack.c.l.b16 %v463
        %v481 = vpack.c.b16 %v478, %v477
        %v482 = vpack.c.b16 %v480, %v479
        %vm485 = vcmask 261120
        %v487 = vsel %vm485, %v472, 0
        %489 = vmatpush.bf16.msra.mxu0 0
        %490 = vmatpush.bf16.msra.mxu0 0
        %491 = vmatpush.bf16.msra.mxu0 0
        %492 = vmatpush.bf16.msra.mxu0 0
        %493 = vmatpush.bf16.msra.mxu0 0
        %494 = vmatpush.bf16.msra.mxu0 0
        %495 = vmatpush.bf16.msra.mxu0 %v482
        %496 = vmatpush.bf16.msra.mxu0 %v481
        %497 = vmatmul.bf16.gmra.mxu0 %v487
        %v498 = vpop.f32.mrf.mxu0
        %v499 = vadd.f32 %v466, %v498
        %v500 = vpop.f32.mrf.mxu0
        %v501 = vadd.f32 %v466, %v500
        %502 = vdwg.mxu0
        %v503 = vpack.c.bf16 %v501, %v499
        %v506 = vunpack.c.l.b16 %v458
        %v507 = vunpack.c.l.b16 %v459
        %v508 = vpack.c.b16 %v507, %v506
        %vm509 = vcmask 130048
        %v511 = vsel %vm509, %v508, 0
        %513 = vmatpush.bf16.msra.mxu0 0
        %514 = vmatpush.bf16.msra.mxu0 0
        %515 = vmatpush.bf16.msra.mxu0 0
        %516 = vmatpush.bf16.msra.mxu0 0
        %517 = vmatpush.bf16.msra.mxu0 0
        %518 = vmatpush.bf16.msra.mxu0 0
        %519 = vmatpush.bf16.msra.mxu0 0
        %520 = vmatpush.bf16.msra.mxu0 %v503
        %521 = vmatmul.bf16.gmra.mxu0 %v511
        %v522 = vpop.f32.mrf.mxu0
        %v523 = vadd.f32 0.0, %v522
        %v524 = vpop.f32.mrf.mxu0
        %v525 = vadd.f32 0.0, %v524
        %526 = vdwg.mxu0
        %v527 = vmax.f32 %v523, 0.0
        %v528 = vmax.f32 %v525, 0.0
        %v529 = vpack.c.bf16 %v528, %v527
        %v530 = vld [vmem:[#allocation8] sm:$0xf]
        %v531 = vld [vmem:[#allocation8 + $0x4] sm:$0xf]
        %v532 = vld [vmem:[#allocation8 + $0x8] sm:$0xf]
        %v533 = vld [vmem:[#allocation8 + $0xc] sm:$0xf]
        %v534 = vld [vmem:[%s5] sm:$0x1]
        %v536 = vperm.slane %v534, 0
        %v542 = vunpack.c.l.b16 %v530
        %v543 = vunpack.c.l.b16 %v531
        %v544 = vunpack.c.l.b16 %v532
        %v545 = vunpack.c.l.b16 %v533
        %v546 = vpack.c.b16 %v543, %v542
        %v547 = vpack.c.b16 %v545, %v544
        %v551 = vsel %vm485, %v529, 0
        %553 = vmatpush.bf16.msra.mxu0 0
        %554 = vmatpush.bf16.msra.mxu0 0
        %555 = vmatpush.bf16.msra.mxu0 0
        %556 = vmatpush.bf16.msra.mxu0 0
        %557 = vmatpush.bf16.msra.mxu0 0
        %558 = vmatpush.bf16.msra.mxu0 0
        %559 = vmatpush.bf16.msra.mxu0 %v547
        %560 = vmatpush.bf16.msra.mxu0 %v546
        %561 = vmatmul.bf16.gmra.mxu0 %v551
        %v562 = vpop.f32.mrf.mxu0
        %v563 = vadd.f32 %v536, %v562
        %v564 = vpop.f32.mrf.mxu0
        %v565 = vadd.f32 %v536, %v564
        %566 = vdwg.mxu0
        %v567 = vpack.c.bf16 %v565, %v563
        %568 = vmatpush.bf16.msra.mxu0 0
        %569 = vmatpush.bf16.msra.mxu0 0
        %570 = vmatpush.bf16.msra.mxu0 0
        %571 = vmatpush.bf16.msra.mxu0 0
        %572 = vmatpush.bf16.msra.mxu0 0
        %573 = vmatpush.bf16.msra.mxu0 0
        %574 = vmatpush.bf16.msra.mxu0 0
        %575 = vmatpush.bf16.msra.mxu0 %v567
        %576 = vmatmul.bf16.gmra.mxu0 %v511
        %v577 = vpop.f32.mrf.mxu0
        %v578 = vadd.f32 0.0, %v577
        %v579 = vpop.f32.mrf.mxu0
        %v580 = vadd.f32 0.0, %v579
        %581 = vdwg.mxu0
        %v582 = vmax.f32 %v578, 0.0
        %v583 = vmax.f32 %v580, 0.0
        %584 = vst [vmem:[%s454] sm:$0xff] %v582
        %585 = vst [vmem:[%s454 + $0x8] sm:$0xff] %v583
        %v586 = vpack.c.bf16 %v583, %v582
        %v587 = vld [vmem:[#allocation10] sm:$0xf]
        %v588 = vld [vmem:[#allocation10 + $0x4] sm:$0xf]
        %v589 = vld [vmem:[#allocation10 + $0x8] sm:$0xf]
        %v590 = vld [vmem:[#allocation10 + $0xc] sm:$0xf]
        %v591 = vld [vmem:[#allocation10 + $0x10] sm:$0xf]
        %v592 = vld [vmem:[#allocation10 + $0x14] sm:$0xf]
        %v593 = vld [vmem:[#allocation10 + $0x18] sm:$0xf]
        %v594 = vld [vmem:[#allocation10 + $0x1c] sm:$0xf]
        %v595 = vld [vmem:[#allocation10 + $0x20] sm:$0xf]
        %v596 = vld [vmem:[#allocation10 + $0x24] sm:$0xf]
        %v597 = vld [vmem:[#allocation10 + $0x28] sm:$0xf]
        %v598 = vld [vmem:[#allocation10 + $0x2c] sm:$0xf]
        %v599 = vld [vmem:[#allocation10 + $0x30] sm:$0xf]
        %v600 = vld [vmem:[#allocation10 + $0x34] sm:$0xf]
        %v601 = vld [vmem:[#allocation10 + $0x38] sm:$0xf]
        %v602 = vld [vmem:[#allocation10 + $0x3c] sm:$0xf]
        %v603 = vld [vmem:[%s7] sm:$0x1]
        %v605 = vperm.slane %v603, 0
        %v623 = vunpack.c.l.b16 %v587
        %v624 = vunpack.c.l.b16 %v588
        %v625 = vunpack.c.l.b16 %v589
        %v626 = vunpack.c.l.b16 %v590
        %v627 = vunpack.c.l.b16 %v591
        %v628 = vunpack.c.l.b16 %v592
        %v629 = vunpack.c.l.b16 %v593
        %v630 = vunpack.c.l.b16 %v594
        %v631 = vunpack.c.l.b16 %v595
        %v632 = vunpack.c.l.b16 %v596
        %v633 = vunpack.c.l.b16 %v597
        %v634 = vunpack.c.l.b16 %v598
        %v635 = vunpack.c.l.b16 %v599
        %v636 = vunpack.c.l.b16 %v600
        %v637 = vunpack.c.l.b16 %v601
        %v638 = vunpack.c.l.b16 %v602
        %v639 = vpack.c.b16 %v624, %v623
        %v640 = vpack.c.b16 %v626, %v625
        %v641 = vpack.c.b16 %v628, %v627
        %v642 = vpack.c.b16 %v630, %v629
        %v643 = vpack.c.b16 %v632, %v631
        %v644 = vpack.c.b16 %v634, %v633
        %v645 = vpack.c.b16 %v636, %v635
        %v646 = vpack.c.b16 %v638, %v637
        %655 = vmatpush.bf16.msra.mxu0 %v646
        %656 = vmatpush.bf16.msra.mxu0 %v645
        %657 = vmatpush.bf16.msra.mxu0 %v644
        %658 = vmatpush.bf16.msra.mxu0 %v643
        %659 = vmatpush.bf16.msra.mxu0 %v642
        %660 = vmatpush.bf16.msra.mxu0 %v641
        %661 = vmatpush.bf16.msra.mxu0 %v640
        %662 = vmatpush.bf16.msra.mxu0 %v639
        %663 = vmatmul.bf16.gmra.mxu0 %v586
        %v664 = vpop.f32.mrf.mxu0
        %v665 = vadd.f32 %v605, %v664
        %v666 = vpop.f32.mrf.mxu0
        %v667 = vadd.f32 %v605, %v666
        %668 = vdwg.mxu0
        %669 = vmax.xlane.f32.xlu0 %v665
        %v670 = vpop.xlane.xlu0 %669
        %671 = vmax.xlane.f32.xlu0 %v667
        %v672 = vpop.xlane.xlu0 %671
        %v673 = vsub.f32 %v665, %v670
        %v674 = vsub.f32 %v667, %v672
        %v675 = vmul.f32 %v673, 1.442695
        %v676 = vpow.pop %v675
        %v677 = vmul.f32 %v674, 1.442695
        %v678 = vpow.pop %v677
        %679 = vadd.xlane.f32.xlu0 %v676
        %v680 = vpop.xlane.xlu0 %679
        %681 = vadd.xlane.f32.xlu0 %v678
        %v682 = vpop.xlane.xlu0 %681
        %v683 = vlog2.pop %v680
        %v684 = vmul.f32 %v683, 0.6931472
        %v685 = vlog2.pop %v682
        %v686 = vmul.f32 %v685, 0.6931472
        %v687 = vsub.f32 %v673, %v684
        %v688 = vsub.f32 %v674, %v686
        %689 = vst [vmem:[%s447] sm:$0xff] %v687
        %690 = vst [vmem:[%s447 + $0x8] sm:$0xff] %v688
        %s691 = sand.u32 %s220, 1
        %s692 = scalar_lea.sflag [#allocation4], %s691
        %s693 = sand.u32 %s220, 1
        %s694 = smul.addr %s693, 16
        %s695 = scalar_lea.vmem [#allocation11], %s694
        %s696 = sand.u32 %s246, 1
        %s697 = scalar_lea.sflag [#allocation13], %s696
        %s698 = sand.u32 %s246, 1
        %s699 = smul.addr %s698, 16
        %s700 = scalar_lea.vmem [#allocation12], %s699
        // Predicated region
        $region73: #{tpu_custom_call.1} parent=51 // pred_check
          %p701 = pneg %p230
        $region74: #{tpu_custom_call.1} parent=51 // pred_check_branch
          %703 = sbr.rel (%p701) target = $region76
        $region75: #{tpu_custom_call.1} parent=51 // pred_region
          %705 = vsyncadd %s692, 0
          %s706 = smul.addr %s34, 2
          %s707 = smul.addr %s706, 8
          %s708 = scalar_lea.hbm %s8, %s707
          %s709 = sshll.u32 %s695, 4
          %s710 = int_to_ptr.vmem [resolvable:$true] %s709
          %s711 = sshll.u32 %s708, 4
          %s712 = int_to_ptr.hbm [resolvable:$true] %s711
          %717 = dma.vmem_to_hbm [thread:$0]  %s710, 256, %s712, %s692, 128, 128, 8
        $region76: #{tpu_custom_call.1} parent=51 // pred_fallthru
          _
        // Predicated region
        $region77: #{tpu_custom_call.1} parent=51 // pred_check
          %p718 = pneg %p256
        $region78: #{tpu_custom_call.1} parent=51 // pred_check_branch
          %720 = sbr.rel (%p718) target = $region80
        $region79: #{tpu_custom_call.1} parent=51 // pred_region
          %722 = vsyncadd %s697, 0
          %s723 = smul.addr %s34, 2
          %s724 = smul.addr %s723, 8
          %s725 = scalar_lea.hbm %s9, %s724
          %s726 = sshll.u32 %s700, 4
          %s727 = int_to_ptr.vmem [resolvable:$true] %s726
          %s728 = sshll.u32 %s725, 4
          %s729 = int_to_ptr.hbm [resolvable:$true] %s728
          %734 = dma.vmem_to_hbm [thread:$0]  %s727, 256, %s729, %s697, 128, 128, 8
        $region80: #{tpu_custom_call.1} parent=51 // pred_fallthru
          _
      $region52: #{tpu_custom_call.1} parent=5 // pred_fallthru
        _
      %p735 = scmp.le.s32.totalorder 2, %s29
      // Predicated region
      $region81: #{tpu_custom_call.1} parent=5 // pred_check
        %p736 = pneg %p735
      $region82: #{tpu_custom_call.1} parent=5 // pred_check_branch
        %738 = sbr.rel (%p736) target = $region84
      $region83: #{tpu_custom_call.1} parent=5 // pred_region
        %s739 = ssub.s32 %s29, 2
        // Predicated region
        $region85: #{tpu_custom_call.1} parent=83 // pred_check
          %p740 = pneg %p236
        $region86: #{tpu_custom_call.1} parent=83 // pred_check_branch
          %742 = sbr.rel (%p740) target = $region88
        $region87: #{tpu_custom_call.1} parent=83 // pred_region
          %s743 = sand.u32 %s221, 1
          %s744 = scalar_lea.sflag [#allocation4], %s743
          %s745 = sand.u32 %s221, 1
          %s746 = smul.addr %s745, 16
          %s747 = scalar_lea.vmem [#allocation11], %s746
          %749 = dma.done %s744, 256
        $region88: #{tpu_custom_call.1} parent=83 // pred_fallthru
          _
        // Predicated region
        $region89: #{tpu_custom_call.1} parent=83 // pred_check
          %p750 = pneg %p262
        $region90: #{tpu_custom_call.1} parent=83 // pred_check_branch
          %752 = sbr.rel (%p750) target = $region92
        $region91: #{tpu_custom_call.1} parent=83 // pred_region
          %s753 = sand.u32 %s247, 1
          %s754 = scalar_lea.sflag [#allocation13], %s753
          %s755 = sand.u32 %s247, 1
          %s756 = smul.addr %s755, 16
          %s757 = scalar_lea.vmem [#allocation12], %s756
          %759 = dma.done %s754, 256
        $region92: #{tpu_custom_call.1} parent=83 // pred_fallthru
          _
      $region84: #{tpu_custom_call.1} parent=5 // pred_fallthru
        _
    $region6: #{tpu_custom_call.1} parent=1 // loop_footer
      %s33 = sadd.s32 1, %s29
    $region7: #{tpu_custom_call.1} parent=1 // loop_footer_branch
      %28 = sbr.rel target = $region3
    $region8: #{tpu_custom_call.1} parent=1 // loop_exit
      _
    %760 = vsyncpa [#allocation3], 1
    %s761 = scalar_lea.sflag [#allocation3], 1
    %762 = vsyncpa %s761, 1
    %763 = vsyncpa [#allocation6], 1
    %s764 = scalar_lea.sflag [#allocation6], 1
    %765 = vsyncpa %s764, 1
    %766 = vsyncpa [#allocation9], 1
    %767 = vsyncpa [#allocation4], 1
    %s768 = scalar_lea.sflag [#allocation4], 1
    %769 = vsyncpa %s768, 1
    %770 = vsyncpa [#allocation13], 1
    %s771 = scalar_lea.sflag [#allocation13], 1
    %772 = vsyncpa %s771, 1

</llo_original>
